<compile_context>
chip_gen: v5e
topology: v5e:2x2
jax: 0.10.0
libtpu: 0.0.40
codegen_flags: <defaults>
</compile_context>

<pallas_src>
import jax
import jax.numpy as jnp
from jax.experimental import pallas as pl
from jax.experimental.pallas import tpu as pltpu


def _layer_scale_kernel(x_ref, gamma_ref, o_ref):
    # x_ref:     (TILE_R, TILE_L) tile of the flattened (N, C*H*W) input
    # gamma_ref: (1, TILE_L)      per-lane scale (gamma[c] repeated H*W times)
    # o_ref:     (TILE_R, TILE_L)
    o_ref[...] = (x_ref[...] * gamma_ref[...]).astype(o_ref.dtype)


def _vmem_capacity_bytes() -> int:
    """Physical VMEM of the attached TPU; conservative fallback if unknown."""
    try:
        info = pltpu.get_tpu_info()
        for name in ("vmem_capacity_bytes", "vmem_size_bytes", "vmem_bytes"):
            cap = getattr(info, name, None)
            if cap:
                return int(cap)
    except Exception:
        pass
    return 64 * 1024 * 1024  # v7x physical VMEM -> safe everywhere


def layer_scale_2d(x, gamma, *, donate_x=True, max_block_bytes=16 * 1024 * 1024):
    """y = x * gamma.  x: (N, C, H, W); gamma: (1, C, 1, 1) -> (N, C, H, W)."""
    N, C, H, W = x.shape
    HW = H * W
    R, L = N, C * HW

    x_flat = x.reshape(R, L)
    # (1, C*H*W) lane vector: gamma[c] repeated H*W times.  Only C*H*W scalars.
    gamma_lane = jnp.broadcast_to(gamma.reshape(C, 1), (C, HW)).reshape(1, L)

    itemsize = int(jnp.dtype(x.dtype).itemsize)
    gamma_isz = int(jnp.dtype(gamma_lane.dtype).itemsize)

    LANE_Q = 128
    ROW_Q = 8 * max(1, 4 // itemsize)  # f32 -> 8, bf16 -> 16, int8/fp8 -> 32

    def pad_to(v, q):
        return -(-v // q) * q

    # Generation-aware working-set budget (review: <=~48 MiB on v7x, up to
    # ~96 MiB on v5e/v6e, well above v5e's 16 MiB scoped default).
    vmem_limit = min(96 * 1024 * 1024, (3 * _vmem_capacity_bytes()) // 4)

    lanes_padded_full = pad_to(L, LANE_Q)
    # gamma block is sublane-padded to 8 rows and double-buffered.
    gamma_resident = 2 * 8 * lanes_padded_full * gamma_isz

    # --- Preferred: full-extent lane tiles (contiguous DMA), split rows only. ---
    min_block = pad_to(min(R, ROW_Q), ROW_Q) * lanes_padded_full * itemsize
    x_budget = vmem_limit - gamma_resident
    if x_budget >= 4 * min_block:  # x + out, each double-buffered
        tile_l = L
        block_target = min(max_block_bytes, x_budget // 4)
        rows = block_target // (lanes_padded_full * itemsize)
        tile_r = min(R, max(ROW_Q, (rows // ROW_Q) * ROW_Q))
    else:
        # --- Fallback: a full-width 8-row strip is too big; split lanes. ---
        tile_r = min(R, ROW_Q)
        block_target = min(max_block_bytes, vmem_limit // 6)
        lanes = block_target // (pad_to(tile_r, ROW_Q) * itemsize)
        tile_l = min(L, max(LANE_Q, (lanes // LANE_Q) * LANE_Q))

    grid_r = pl.cdiv(R, tile_r)
    grid_l = pl.cdiv(L, tile_l)

    # v7x has 2 TensorCores sharing 3.2 TB/s HBM: keep >= 2 parallel grid steps
    # when the array is big enough to be worth splitting (no-op on v5e/v6e).
    if grid_r * grid_l == 1 and R * L * itemsize >= (4 * 1024 * 1024):
        if tile_r >= 2 * ROW_Q:
            tile_r = (tile_r // 2 // ROW_Q) * ROW_Q
        elif tile_l >= 2 * LANE_Q:
            tile_l = (tile_l // 2 // LANE_Q) * LANE_Q
        grid_r = pl.cdiv(R, tile_r)
        grid_l = pl.cdiv(L, tile_l)

    # Lanes outer, rows inner: gamma's block index (0, j) is constant across the
    # whole inner row sweep, so it is not re-DMA'd per step.
    grid = (grid_l, grid_r)

    cost = pl.CostEstimate(
        flops=R * L,
        transcendentals=0,
        bytes_accessed=2 * R * L * itemsize + L * gamma_isz,
    )

    extra_kwargs = {}
    if donate_x:
        # In-place semantics of the original module (x.mul_(gamma)); XLA copies
        # the operand if the caller still needs x.
        extra_kwargs["input_output_aliases"] = {0: 0}

    out_flat = pl.pallas_call(
        _layer_scale_kernel,
        out_shape=jax.ShapeDtypeStruct((R, L), x.dtype),
        grid_spec=pltpu.PrefetchScalarGridSpec(
            num_scalar_prefetch=0,
            grid=grid,
            in_specs=[
                pl.BlockSpec((tile_r, tile_l), lambda j, i: (i, j)),
                pl.BlockSpec((1, tile_l), lambda j, i: (0, j)),
            ],
            out_specs=pl.BlockSpec((tile_r, tile_l), lambda j, i: (i, j)),
        ),
        compiler_params=pltpu.CompilerParams(
            dimension_semantics=("parallel", "parallel"),
            vmem_limit_bytes=vmem_limit,
        ),
        cost_estimate=cost,
        **extra_kwargs,
    )(x_flat, gamma_lane)

    return out_flat.reshape(N, C, H, W)


if __name__ == "__main__":
    # Matches nn.Parameter(init_values * torch.ones(1, dim, 1, 1)).
    N, C, H, W = 2, 4, 16, 16
    init_values = 1e-05
    gamma = init_values * jnp.ones((1, C, 1, 1), dtype=jnp.float32)

    key = jax.random.PRNGKey(0)
    x = jax.random.normal(key, (N, C, H, W), dtype=jnp.float32)

    # Reference computed up-front (kernel mirrors the module's in-place mul_).
    y_ref = x * gamma

    y = layer_scale_2d(x, gamma)
    jax.block_until_ready(y)

    assert y.shape == (N, C, H, W)
    assert jnp.allclose(y, y_ref, atol=0.0, rtol=0.0), "mismatch vs reference"

    print("KERNEL_OK")
</pallas_src>

<mosaic_0001>
module attributes {stable_mosaic.version = 11 : i64} {
  func.func @_layer_scale_kernel(%arg0: i32, %arg1: i32, %arg2: memref<2x1024xf32, #tpu.memory_space<vmem>>, %arg3: memref<1x1024xf32, #tpu.memory_space<vmem>>, %arg4: memref<2x1024xf32, #tpu.memory_space<vmem>>) attributes {dimension_semantics = [#tpu.dimension_semantics<parallel>, #tpu.dimension_semantics<parallel>], iteration_bounds = array<i64: 1, 1>, scalar_prefetch = 0 : i64, scratch_operands = 0 : i64, tpu.core_type = #tpu.core_type<tc>, window_params = [{transform_indices = @transform_0, window_bounds = array<i64: 2, 1024>}, {transform_indices = @transform_1, window_bounds = array<i64: 1, 1024>}, {transform_indices = @transform_2, window_bounds = array<i64: 2, 1024>}]} {
    %c0 = arith.constant 0 : index
    %c0_0 = arith.constant 0 : index
    %0 = vector.load %arg2[%c0, %c0_0] : memref<2x1024xf32, #tpu.memory_space<vmem>>, vector<2x1024xf32>
    %c0_1 = arith.constant 0 : index
    %c0_2 = arith.constant 0 : index
    %1 = vector.load %arg3[%c0_1, %c0_2] : memref<1x1024xf32, #tpu.memory_space<vmem>>, vector<1x1024xf32>
    %2 = vector.broadcast %1 : vector<1x1024xf32> to vector<2x1024xf32>
    %3 = arith.mulf %0, %2 : vector<2x1024xf32>
    %c0_3 = arith.constant 0 : index
    %c0_4 = arith.constant 0 : index
    %4 = vector.load %arg4[%c0_3, %c0_4] : memref<2x1024xf32, #tpu.memory_space<vmem>>, vector<2x1024xf32>
    tpu.vector_store %arg4[%c0_3, %c0_4], %3 {strides = array<i32>} : memref<2x1024xf32, #tpu.memory_space<vmem>>, vector<2x1024xf32>,
    return
  }
  func.func @transform_0(%arg0: i32, %arg1: i32) -> (i32, i32) {
    %c0_i32 = arith.constant 0 : i32
    return %arg1, %arg0 : i32, i32
  }
  func.func @transform_1(%arg0: i32, %arg1: i32) -> (i32, i32) {
    %c0_i32 = arith.constant 0 : i32
    %c0_i32_0 = arith.constant 0 : i32
    return %c0_i32, %arg0 : i32, i32
  }
  func.func @transform_2(%arg0: i32, %arg1: i32) -> (i32, i32) {
    %c0_i32 = arith.constant 0 : i32
    return %arg1, %arg0 : i32, i32
  }
}

</mosaic_0001>

<llo_original>
// kernel: tpu_custom_call.1
$region0: #{tpu_custom_call.1}
  #allocation0 [shape = 'u32[]', space=smem, size = 0x4, offset = 0x4, fixed_abs, tag = 'smem constant byte address 0x4 - core index']
  #allocation1 [shape = 'u32[72,128]{1,0:T(1,128)}', space=vmem, size = 0x9000, scoped, tag = 'internal scratch']
  %s0 = inlined_call_operand.hbm [shape: f32[2,1024], index: 0, kind: input, shape index: {}, may-alias: {0,2}]
  %s1 = inlined_call_operand.vmem [shape: f32[1,1024], index: 1, kind: input, shape index: {}]
  %s2 = inlined_call_operand.hbm [shape: f32[2,1024], index: 2, kind: output, shape index: {}, may-alias: {0,2}]
  %s3 = sld [smem:[#allocation0]]
  $region22: #{tpu_custom_call.1} parent=0
    _
  %s5 = ssub.s32 1, %s3
  %s6 = scalar_select 0, %s5, %s3
  $region1: #{tpu_custom_call.1} parent=0
    #allocation2 [shape = 'u8[8192]{0}', space=vmem, size = 0x2000, scoped, tag = 'input window, operand 0, single buffered']
    #allocation3 [shape = 's32[1]{0}', space=sflag, size = 0x4, scoped, tag = 'scoped memory for tpu_custom_call.1']
    #allocation4 [shape = 's32[1]{0}', space=sflag, size = 0x4, scoped, tag = 'scoped memory for tpu_custom_call.1']
    #allocation5 [shape = 'u8[8192]{0}', space=vmem, size = 0x2000, scoped, tag = 'output window, operand 0, single buffered']
    %7 = vsyncpa [#allocation3], 0
    %8 = vsyncpa [#allocation4], 0
    // Predicated region
    $region2: #{tpu_custom_call.1} parent=1 // pred_check
      _
    $region3: #{tpu_custom_call.1} parent=1 // pred_check_branch
      %10 = sbr.rel (0) target = $region5
    $region4: #{tpu_custom_call.1} parent=1 // pred_region
      %12 = vsyncadd [#allocation3], 0
      %s14 = sshll.u32 %s0, 4
      %s15 = int_to_ptr.hbm [resolvable:$true] %s14
      %s16 = sshll.u32 [#allocation2], 4
      %s17 = int_to_ptr.vmem [resolvable:$true] %s16
      %19 = dma.hbm_to_vmem [thread:$0]  %s15, 256, %s17, [#allocation3]
    $region5: #{tpu_custom_call.1} parent=1 // pred_fallthru
      _
    // Predicated region
    $region6: #{tpu_custom_call.1} parent=1 // pred_check
      _
    $region7: #{tpu_custom_call.1} parent=1 // pred_check_branch
      %21 = sbr.rel (0) target = $region9
    $region8: #{tpu_custom_call.1} parent=1 // pred_region
      _
    $region9: #{tpu_custom_call.1} parent=1 // pred_fallthru
      _
    // Predicated region
    $region10: #{tpu_custom_call.1} parent=1 // pred_check
      _
    $region11: #{tpu_custom_call.1} parent=1 // pred_check_branch
      %23 = sbr.rel (0) target = $region13
    $region12: #{tpu_custom_call.1} parent=1 // pred_region
      %25 = dma.done [#allocation3], 256
    $region13: #{tpu_custom_call.1} parent=1 // pred_fallthru
      _
    %v26 = vld [vmem:[#allocation2] sm:$0xff]
    %v27 = vld [vmem:[#allocation2 + $0x8] sm:$0xff]
    %v28 = vld [vmem:[%s1] sm:$0xff]
    %v30 = vperm.slane %v28, 0
    %v31 = vperm.slane %v28, 1
    %v32 = vperm.slane %v28, 2
    %v33 = vperm.slane %v28, 3
    %v34 = vperm.slane %v28, 4
    %v35 = vperm.slane %v28, 5
    %v36 = vperm.slane %v28, 6
    %v37 = vperm.slane %v28, 7
    %v38 = vrot.slane %v31, 6
    %v39 = vrot.slane %v32, 4
    %v40 = vrot.slane %v33, 2
    %v41 = vrot.slane %v35, 6
    %v42 = vrot.slane %v36, 4
    %v43 = vrot.slane %v37, 2
    %vm44 = vcmask 1041408
    %v45 = vsel %vm44, %v30, %v38
    %vm46 = vcmask 1045508
    %v47 = vsel %vm46, %v39, %v40
    %vm48 = vcmask 1043456
    %v49 = vsel %vm48, %v45, %v47
    %v50 = vsel %vm44, %v34, %v41
    %v51 = vsel %vm46, %v42, %v43
    %v52 = vsel %vm48, %v50, %v51
    %v55 = vmul.f32 %v26, %v49
    %v56 = vmul.f32 %v27, %v52
    %57 = vst [vmem:[#allocation5] sm:$0xff] %v55
    %58 = vst [vmem:[#allocation5 + $0x8] sm:$0xff] %v56
    // Predicated region
    $region14: #{tpu_custom_call.1} parent=1 // pred_check
      _
    $region15: #{tpu_custom_call.1} parent=1 // pred_check_branch
      %60 = sbr.rel (0) target = $region17
    $region16: #{tpu_custom_call.1} parent=1 // pred_region
      %62 = vsyncadd [#allocation4], 0
      %s64 = sshll.u32 [#allocation5], 4
      %s65 = int_to_ptr.vmem [resolvable:$true] %s64
      %s66 = sshll.u32 %s2, 4
      %s67 = int_to_ptr.hbm [resolvable:$true] %s66
      %69 = dma.vmem_to_hbm [thread:$0]  %s65, 256, %s67, [#allocation4]
    $region17: #{tpu_custom_call.1} parent=1 // pred_fallthru
      _
    // Predicated region
    $region18: #{tpu_custom_call.1} parent=1 // pred_check
      _
    $region19: #{tpu_custom_call.1} parent=1 // pred_check_branch
      %71 = sbr.rel (0) target = $region21
    $region20: #{tpu_custom_call.1} parent=1 // pred_region
      %73 = dma.done [#allocation4], 256
    $region21: #{tpu_custom_call.1} parent=1 // pred_fallthru
      _
    %74 = vsyncpa [#allocation3], 1
    %75 = vsyncpa [#allocation4], 1

</llo_original>
